<compile_context>
chip_gen: v6e
topology: v6e:2x2x1
jax: 0.10.0
libtpu: 0.0.40
codegen_flags: <defaults>
</compile_context>

<pallas_src>
import jax
import jax.numpy as jnp
from jax.experimental import pallas as pl
from jax.experimental.pallas import tpu as pltpu

_MiB = 1024 * 1024
_SUBLANE = 32            # row-block multiple that is layout-legal for f32/bf16/int8
_TINY_BYTES = 256 * 1024  # below this input size, jnp.tile beats a kernel launch


def _vmem_budget_and_limit():
    """(double-buffered working-set budget, vmem_limit_bytes), per TPU generation."""
    vmem_cap = None
    try:
        vmem_cap = getattr(pltpu.get_tpu_info(), "vmem_capacity_bytes", None)
    except Exception:
        vmem_cap = None
    if vmem_cap is None:
        return 12 * _MiB, 32 * _MiB              # conservative: fits every generation
    if vmem_cap >= 100 * _MiB:                   # v5e / v6e: 128 MiB physical VMEM
        return 40 * _MiB, 80 * _MiB
    return 24 * _MiB, 48 * _MiB                  # v7x: 64 MiB per TensorCore


def _repeat4_kernel(w_ref, o_ref):
    """(T, L) input tile -> four static lane slices of the (T, 4L) output tile."""
    wv = w_ref[...]
    L = w_ref.shape[-1]
    # Static unroll: four slice stores, no concat / VMEM temporaries.
    # Full unmasked vst when L % 128 == 0; masked (slower, still correct) otherwise.
    for k in range(4):
        o_ref[:, k * L:(k + 1) * L] = wv


def _copy_kernel(w_ref, o_ref):
    """Lane-tiled fallback body: plain tile copy (replication is done by the grid)."""
    o_ref[...] = w_ref[...]


def _pick_row_tile(rows, L, itemsize, budget):
    """Row tile for the full-L path, or None if even a minimal block busts the budget."""
    t_min = min(rows, _SUBLANE)
    # Double-buffered per-step footprint: 2*(T*L in + T*4L out) = 10*T*L*itemsize.
    if 10 * t_min * L * itemsize > budget:
        return None                              # huge L -> take the lane-tiled path
    cap = max(t_min, budget // (10 * L * itemsize))
    if rows < 2 * _SUBLANE:
        return rows                              # too small to split; full extent is legal
    # >= 2 grid steps: shards across v7x's two TCs and keeps read/write DMAs pipelined.
    half = pl.cdiv(rows, 2)
    return max(_SUBLANE, (min(cap, half) // _SUBLANE) * _SUBLANE)


def consecutive_cat(w: jax.Array, *, force_pallas: bool = False,
                    _budget_override: int | None = None) -> jax.Array:
    """z = cat([cat([w, w], 2), cat([w, w], 2)], 2)  ==  w repeated 4x along dim 2."""
    B, C, L = w.shape
    rows = B * C
    itemsize = jnp.dtype(w.dtype).itemsize
    in_bytes = rows * L * itemsize

    # Tiny inputs: fixed launch + DMA-descriptor overhead dominates a 5N-byte copy.
    if not force_pallas and in_bytes < _TINY_BYTES:
        return jnp.tile(w, (1, 1, 4))

    budget, vmem_limit = _vmem_budget_and_limit()
    if _budget_override is not None:
        budget = _budget_override

    w2 = w.reshape(rows, L)                      # free: contiguous row-major
    cost = pl.CostEstimate(flops=0, transcendentals=0,
                           bytes_accessed=5 * in_bytes)  # read N, write 4N

    T = _pick_row_tile(rows, L, itemsize, budget)

    if T is not None:
        # Main path: 1-D row grid (>= 2 steps when rows permit), full-L blocks,
        # four lane-slice stores per step.
        out2 = pl.pallas_call(
            _repeat4_kernel,
            out_shape=jax.ShapeDtypeStruct((rows, 4 * L), w.dtype),
            grid=(pl.cdiv(rows, T),),
            in_specs=[pl.BlockSpec((T, L), lambda i: (i, 0))],
            out_specs=pl.BlockSpec((T, 4 * L), lambda i: (i, 0)),
            compiler_params=pltpu.CompilerParams(
                dimension_semantics=("parallel",),
                vmem_limit_bytes=vmem_limit,
            ),
            cost_estimate=cost,
        )(w2)
        return out2.reshape(B, C, 4 * L)

    # Huge-L fallback: output viewed as (rows, 4, L), lanes tiled, innermost
    # length-4 replica axis. The input index_map is constant across the replica
    # axis, so the input block stays VMEM-resident and is not re-DMA'd
    # (HBM traffic remains exactly 5N).
    T = min(rows, _SUBLANE)
    TL = budget // (4 * T * itemsize)            # 2x(in) + 2x(out) double buffers
    TL = min(L, max(128, (TL // 128) * 128))
    n_lane = pl.cdiv(L, TL)

    out3 = pl.pallas_call(
        _copy_kernel,
        out_shape=jax.ShapeDtypeStruct((rows, 4, L), w.dtype),
        grid=(pl.cdiv(rows, T), n_lane, 4),
        in_specs=[pl.BlockSpec((T, TL), lambda i, j, k: (i, j))],
        out_specs=pl.BlockSpec((T, None, TL), lambda i, j, k: (i, k, j)),
        compiler_params=pltpu.CompilerParams(
            dimension_semantics=("parallel", "arbitrary", "arbitrary"),
            vmem_limit_bytes=vmem_limit,
        ),
        cost_estimate=cost,
    )(w2)
    return out3.reshape(B, C, 4 * L)


if __name__ == "__main__":
    key = jax.random.PRNGKey(0)
    k1, k2, k3 = jax.random.split(key, 3)

    def torch_ref(w):
        # Mirrors the torch graph exactly.
        x = jnp.concatenate([w, w], axis=2)
        y = jnp.concatenate([w, w], axis=2)
        return jnp.concatenate([x, y], axis=2)

    # 1) Small shape (module example (1, 2, 3), scaled to TPU-friendly dims),
    #    forced through the Pallas kernel.
    w_small = jax.random.normal(k1, (2, 4, 16), dtype=jnp.float32)
    z_small = jax.block_until_ready(consecutive_cat(w_small, force_pallas=True))
    assert z_small.shape == (2, 4, 64), z_small.shape
    assert z_small.dtype == w_small.dtype
    assert jnp.array_equal(z_small, torch_ref(w_small)), "small-path mismatch"

    # 2) Medium shape: exercises the >= 2-step row grid (pipelined, megacore-shardable).
    w_med = jax.random.normal(k2, (2, 256, 512), dtype=jnp.float32)
    z_med = jax.block_until_ready(consecutive_cat(w_med))
    assert jnp.array_equal(z_med, torch_ref(w_med)), "medium-path mismatch"

    # 3) Lane-tiled huge-L fallback, forced via a tiny budget (also tests a
    #    partial lane block: 400 % 128 != 0).
    w_lane = jax.random.normal(k3, (2, 64, 400), dtype=jnp.float32)
    z_lane = jax.block_until_ready(
        consecutive_cat(w_lane, force_pallas=True, _budget_override=100_000))
    assert jnp.array_equal(z_lane, torch_ref(w_lane)), "lane-path mismatch"

    print("KERNEL_OK")
</pallas_src>

<mosaic_0001>
module attributes {stable_mosaic.version = 11 : i64} {
  func.func @_repeat4_kernel(%arg0: i32, %arg1: memref<8x16xf32, #tpu.memory_space<vmem>>, %arg2: memref<8x64xf32, #tpu.memory_space<vmem>>) attributes {dimension_semantics = [#tpu.dimension_semantics<parallel>], iteration_bounds = array<i64: 1>, scalar_prefetch = 0 : i64, scratch_operands = 0 : i64, tpu.core_type = #tpu.core_type<tc>, window_params = [{transform_indices = @transform_0, window_bounds = array<i64: 8, 16>}, {transform_indices = @transform_1, window_bounds = array<i64: 8, 64>}]} {
    %c0 = arith.constant 0 : index
    %c0_0 = arith.constant 0 : index
    %0 = vector.load %arg1[%c0, %c0_0] : memref<8x16xf32, #tpu.memory_space<vmem>>, vector<8x16xf32>
    %c0_1 = arith.constant 0 : index
    %c0_2 = arith.constant 0 : index
    %1 = vector.load %arg2[%c0_1, %c0_2] : memref<8x64xf32, #tpu.memory_space<vmem>>, vector<8x16xf32>
    tpu.vector_store %arg2[%c0_1, %c0_2], %0 {strides = array<i32>} : memref<8x64xf32, #tpu.memory_space<vmem>>, vector<8x16xf32>,
    %c0_3 = arith.constant 0 : index
    %c16 = arith.constant 16 : index
    %2 = vector.load %arg2[%c0_3, %c16] : memref<8x64xf32, #tpu.memory_space<vmem>>, vector<8x16xf32>
    tpu.vector_store %arg2[%c0_3, %c16], %0 {strides = array<i32>} : memref<8x64xf32, #tpu.memory_space<vmem>>, vector<8x16xf32>,
    %c0_4 = arith.constant 0 : index
    %c32 = arith.constant 32 : index
    %3 = vector.load %arg2[%c0_4, %c32] : memref<8x64xf32, #tpu.memory_space<vmem>>, vector<8x16xf32>
    tpu.vector_store %arg2[%c0_4, %c32], %0 {strides = array<i32>} : memref<8x64xf32, #tpu.memory_space<vmem>>, vector<8x16xf32>,
    %c0_5 = arith.constant 0 : index
    %c48 = arith.constant 48 : index
    %4 = vector.load %arg2[%c0_5, %c48] : memref<8x64xf32, #tpu.memory_space<vmem>>, vector<8x16xf32>
    tpu.vector_store %arg2[%c0_5, %c48], %0 {strides = array<i32>} : memref<8x64xf32, #tpu.memory_space<vmem>>, vector<8x16xf32>,
    return
  }
  func.func @transform_0(%arg0: i32) -> (i32, i32) {
    %c0_i32 = arith.constant 0 : i32
    %c0_i32_0 = arith.constant 0 : i32
    return %arg0, %c0_i32 : i32, i32
  }
  func.func @transform_1(%arg0: i32) -> (i32, i32) {
    %c0_i32 = arith.constant 0 : i32
    %c0_i32_0 = arith.constant 0 : i32
    return %arg0, %c0_i32 : i32, i32
  }
}

</mosaic_0001>

<llo_original>
// kernel: tpu_custom_call.1
$region0: #{tpu_custom_call.1}
  #allocation0 [shape = 'u32[]', space=smem, size = 0x4, offset = 0x4, fixed_abs, tag = 'smem constant byte address 0x4 - core index']
  #allocation1 [shape = 'u32[144,128]{1,0:T(1,128)}', space=vmem, size = 0x12000, scoped, tag = 'internal scratch']
  %s0 = inlined_call_operand.hbm [shape: f32[8,16], index: 0, kind: input, shape index: {}]
  %s1 = inlined_call_operand.hbm [shape: f32[8,64], index: 1, kind: output, shape index: {}]
  %s2 = sld [smem:[#allocation0]]
  $region18: #{tpu_custom_call.1} parent=0
    _
  %s4 = ssub.s32 1, %s2
  %s5 = scalar_select 0, %s4, %s2
  $region1: #{tpu_custom_call.1} parent=0
    #allocation2 [shape = 'u8[4096]{0}', space=vmem, size = 0x1000, scoped, tag = 'input window, operand 0, single buffered']
    #allocation3 [shape = 's32[1]{0}', space=sflag, size = 0x4, scoped, tag = 'scoped memory for tpu_custom_call.1']
    #allocation4 [shape = 's32[1]{0}', space=sflag, size = 0x4, scoped, tag = 'scoped memory for tpu_custom_call.1']
    #allocation5 [shape = 'u8[4096]{0}', space=vmem, size = 0x1000, scoped, tag = 'output window, operand 0, single buffered']
    %6 = vsyncpa [#allocation3], 0
    %7 = vsyncpa [#allocation4], 0
    // Predicated region
    $region2: #{tpu_custom_call.1} parent=1 // pred_check
      _
    $region3: #{tpu_custom_call.1} parent=1 // pred_check_branch
      %9 = sbr.rel (0) target = $region5
    $region4: #{tpu_custom_call.1} parent=1 // pred_region
      %s11 = ssub.s32 128, 128
      %12 = vsyncadd [#allocation3], %s11
      %s14 = sshll.u32 [#allocation2], 4
      %s15 = int_to_ptr.vmem [resolvable:$true] %s14
      %17 = dma.hbm_to_vmem [thread:$0]  %s0, 128, %s15, [#allocation3]
    $region5: #{tpu_custom_call.1} parent=1 // pred_fallthru
      _
    // Predicated region
    $region6: #{tpu_custom_call.1} parent=1 // pred_check
      _
    $region7: #{tpu_custom_call.1} parent=1 // pred_check_branch
      %19 = sbr.rel (0) target = $region9
    $region8: #{tpu_custom_call.1} parent=1 // pred_region
      %20 = dma.done [#allocation3], 128
    $region9: #{tpu_custom_call.1} parent=1 // pred_fallthru
      _
    %v21 = vld [vmem:[#allocation2] sm:$0xff]
    %vm22 = vcmask 130048
    %23 = vst.msk [vmem:[#allocation5] sm:$0xff] %vm22, %v21
    %25 = vrot.lane.b32.xlu0 %v21, 16
    %v26 = vpop.permute.xlu0 %25
    %vm28 = vcmask 261248
    %29 = vst.msk [vmem:[#allocation5] sm:$0xff] %vm28, %v26
    %30 = vrot.lane.b32.xlu0 %v21, 32
    %v31 = vpop.permute.xlu0 %30
    %vm33 = vcmask 392448
    %34 = vst.msk [vmem:[#allocation5] sm:$0xff] %vm33, %v31
    %35 = vrot.lane.b32.xlu0 %v21, 48
    %v36 = vpop.permute.xlu0 %35
    %vm38 = vcmask 523648
    %39 = vst.msk [vmem:[#allocation5] sm:$0xff] %vm38, %v36
    // Predicated region
    $region10: #{tpu_custom_call.1} parent=1 // pred_check
      _
    $region11: #{tpu_custom_call.1} parent=1 // pred_check_branch
      %41 = sbr.rel (0) target = $region13
    $region12: #{tpu_custom_call.1} parent=1 // pred_region
      %s43 = ssub.s32 128, 128
      %44 = vsyncadd [#allocation4], %s43
      %s46 = sshll.u32 [#allocation5], 4
      %s47 = int_to_ptr.vmem [resolvable:$true] %s46
      %49 = dma.vmem_to_hbm [thread:$0]  %s47, 128, %s1, [#allocation4]
    $region13: #{tpu_custom_call.1} parent=1 // pred_fallthru
      _
    // Predicated region
    $region14: #{tpu_custom_call.1} parent=1 // pred_check
      _
    $region15: #{tpu_custom_call.1} parent=1 // pred_check_branch
      %51 = sbr.rel (0) target = $region17
    $region16: #{tpu_custom_call.1} parent=1 // pred_region
      %52 = dma.done [#allocation4], 128
    $region17: #{tpu_custom_call.1} parent=1 // pred_fallthru
      _
    %53 = vsyncpa [#allocation3], 1
    %54 = vsyncpa [#allocation4], 1

</llo_original>
